<compile_context>
chip_gen: v5e
topology: v5e:2x2
jax: 0.10.0
libtpu: 0.0.40
codegen_flags: <defaults>
</compile_context>

<pallas_src>
import jax
import jax.numpy as jnp
from jax.experimental import pallas as pl
from jax.experimental.pallas import tpu as pltpu

HIDDEN = 768
INTERMEDIATE = 256
NUM_CLASSES = 3
CLASS_PAD = 128       # lane-dense output width (multiple of 128)
BATCH_PAD = 16        # bf16 sublane packing: 16 rows per vreg
MAX_TILE_B = 256      # rows per grid step (keeps per-tile VMEM small on v7x)


def _round_up(x, m):
    return ((x + m - 1) // m) * m


def _fused_cls_mlp_kernel(ids_ref,                       # SMEM (Bp,) int32   (scalar prefetch)
                          embed_ref,                     # HBM  (V, 768) f32  (pl.ANY)
                          mask_ref,                      # VMEM (tile_b, 1) f32
                          w1_ref, b1_ref, w2_ref, b2_ref,
                          out_ref,                       # VMEM (tile_b, 128) f32
                          cls_vmem, sem):                # scratch
    """logits = ReLU(gather(embed, ids) * mask @ W1 + b1) @ W2 + b2."""
    tile_b = out_ref.shape[0]
    base = pl.program_id(0) * tile_b

    # Gather only the CLS rows for this batch tile straight from HBM.
    # TODO(synk): for very large batch tiles, batch the row gathers (the
    #             per-row DMA issue loop becomes the bottleneck before VMEM does).
    @pl.loop(0, tile_b)
    def _start(r):
        pltpu.make_async_copy(embed_ref.at[ids_ref[base + r]],
                              cls_vmem.at[r], sem.at[0]).start()

    @pl.loop(0, tile_b)
    def _wait(r):
        pltpu.make_async_copy(embed_ref.at[ids_ref[base + r]],
                              cls_vmem.at[r], sem.at[0]).wait()

    # Mask-scale in f32, single downcast for the MXU.
    cls_bf = (cls_vmem[...] * mask_ref[...]).astype(jnp.bfloat16)      # (tile_b, 768)

    # First matmul on the MXU, f32 accumulation.
    h = jnp.dot(cls_bf, w1_ref[...], preferred_element_type=jnp.float32)
    # Bias + ReLU on the f32 accumulator (VPU; no bf16 elementwise on v5e).
    h = jnp.maximum(h + b1_ref[...], 0.0)
    # Second matmul; only the activations are downcast, accumulation stays f32.
    logits = jnp.dot(h.astype(jnp.bfloat16), w2_ref[...],
                     preferred_element_type=jnp.float32)               # (tile_b, 128)
    out_ref[...] = logits + b2_ref[...]


def mlp_head_fused(input_ids, attention_mask, prepared):
    """Fused CLS-gather + MLP head.  Returns (B, NUM_CLASSES) f32 logits."""
    embed = prepared["embed_table"]          # f32, stays in HBM
    w1, b1 = prepared["w1_bf16"], prepared["b1_f32"]
    w2, b2 = prepared["w2_bf16_pad"], prepared["b2_f32_pad"]

    B = input_ids.shape[0]
    b16 = _round_up(B, BATCH_PAD)
    tile_b = min(b16, MAX_TILE_B)
    Bp = _round_up(b16, tile_b)
    n_tiles = Bp // tile_b

    # Tiny per-call prep: token-0 ids + mask column, zero-padded to Bp rows.
    cls_ids = jnp.pad(input_ids[:, 0].astype(jnp.int32), (0, Bp - B))
    mask_col = jnp.pad(attention_mask[:, :1].astype(jnp.float32),
                       ((0, Bp - B), (0, 0)))

    grid_spec = pltpu.PrefetchScalarGridSpec(
        num_scalar_prefetch=1,
        grid=(n_tiles,),
        in_specs=[
            pl.BlockSpec(memory_space=pl.ANY),                               # embed table (HBM)
            pl.BlockSpec((tile_b, 1), lambda i, ids: (i, 0)),                # mask column
            pl.BlockSpec((HIDDEN, INTERMEDIATE), lambda i, ids: (0, 0)),     # W1 (VMEM-resident)
            pl.BlockSpec((1, INTERMEDIATE), lambda i, ids: (0, 0)),          # b1
            pl.BlockSpec((INTERMEDIATE, CLASS_PAD), lambda i, ids: (0, 0)),  # W2 (padded, resident)
            pl.BlockSpec((1, CLASS_PAD), lambda i, ids: (0, 0)),             # b2 (padded)
        ],
        out_specs=pl.BlockSpec((tile_b, CLASS_PAD), lambda i, ids: (i, 0)),
        scratch_shapes=[
            pltpu.VMEM((tile_b, HIDDEN), jnp.float32),   # gathered CLS rows (f32)
            pltpu.SemaphoreType.DMA((1,)),
        ],
    )

    out_p = pl.pallas_call(
        _fused_cls_mlp_kernel,
        out_shape=jax.ShapeDtypeStruct((Bp, CLASS_PAD), jnp.float32),
        grid_spec=grid_spec,
        compiler_params=pltpu.CompilerParams(
            dimension_semantics=("parallel",),           # v7x: shard batch tiles across both TCs
            vmem_limit_bytes=32 * 1024 * 1024),
    )(cls_ids, embed, mask_col, w1, b1, w2, b2)

    # Padded batch rows / class columns carry garbage / zeros -- always slice.
    return out_p[:B, :NUM_CLASSES]


def bert_mlp_classifier_forward(input_ids, attention_mask, prepared):
    return mlp_head_fused(input_ids, attention_mask, prepared)


def init_params(key, vocab_size, num_classes):
    """Torch-like f32 parameters (Linear weights stored (in, out))."""
    k_emb, k_w1, k_b1, k_w2, k_b2 = jax.random.split(key, 5)
    lim1 = 1.0 / jnp.sqrt(HIDDEN)
    lim2 = 1.0 / jnp.sqrt(INTERMEDIATE)
    return {
        "embed_table": jax.random.normal(k_emb, (vocab_size, HIDDEN), jnp.float32) * 0.02,
        "w1": jax.random.uniform(k_w1, (HIDDEN, INTERMEDIATE), jnp.float32, -lim1, lim1),
        "b1": jax.random.uniform(k_b1, (1, INTERMEDIATE), jnp.float32, -lim1, lim1),
        "w2": jax.random.uniform(k_w2, (INTERMEDIATE, num_classes), jnp.float32, -lim2, lim2),
        "b2": jax.random.uniform(k_b2, (1, num_classes), jnp.float32, -lim2, lim2),
    }


def prepare_params(params):
    """ONE-TIME cast/pad of the weights (cached); the per-call path does none."""
    C = params["w2"].shape[1]
    return {
        "embed_table": params["embed_table"].astype(jnp.float32),
        "w1_bf16": params["w1"].astype(jnp.bfloat16),
        "b1_f32": params["b1"].astype(jnp.float32),
        "w2_bf16_pad": jnp.pad(params["w2"], ((0, 0), (0, CLASS_PAD - C))).astype(jnp.bfloat16),
        "b2_f32_pad": jnp.pad(params["b2"], ((0, 0), (0, CLASS_PAD - C))).astype(jnp.float32),
    }


if __name__ == "__main__":
    key = jax.random.PRNGKey(0)
    k_params, k_ids = jax.random.split(key, 2)

    B, S, VOCAB = 2, 8, 32
    params = init_params(k_params, VOCAB, NUM_CLASSES)
    prepared = jax.tree_util.tree_map(jax.block_until_ready, prepare_params(params))

    input_ids = jax.random.randint(k_ids, (B, S), 0, VOCAB, dtype=jnp.int32)
    attention_mask = jnp.ones((B, S), dtype=jnp.float32)

    forward = jax.jit(bert_mlp_classifier_forward)
    logits = jax.block_until_ready(forward(input_ids, attention_mask, prepared))
    assert logits.shape == (B, NUM_CLASSES)

    # Deterministic BERT stand-in: CLS-row embedding scaled by mask[:, 0].
    cls_ref = params["embed_table"][input_ids[:, 0]] * attention_mask[:, :1]

    # Reference 1: same mixed-precision (bf16 MXU, f32 acc) math in plain JAX.
    w1_bf = params["w1"].astype(jnp.bfloat16)
    w2_bf = jnp.pad(params["w2"], ((0, 0), (0, CLASS_PAD - NUM_CLASSES))).astype(jnp.bfloat16)
    h_mp = jnp.maximum(
        jnp.dot(cls_ref.astype(jnp.bfloat16), w1_bf,
                preferred_element_type=jnp.float32) + params["b1"], 0.0)
    logits_mp = (jnp.dot(h_mp.astype(jnp.bfloat16), w2_bf,
                         preferred_element_type=jnp.float32)[:, :NUM_CLASSES]
                 + params["b2"])
    assert jnp.allclose(logits, logits_mp, atol=1e-3, rtol=1e-3)

    # Reference 2: full f32 math; relaxed tolerance for the bf16 weight cast.
    h_f32 = jnp.maximum(cls_ref @ params["w1"] + params["b1"], 0.0)
    logits_f32 = h_f32 @ params["w2"] + params["b2"]
    assert jnp.allclose(logits, logits_f32, atol=3e-2, rtol=3e-2)

    print("KERNEL_OK")
</pallas_src>

<mosaic_0001>
module attributes {stable_mosaic.version = 11 : i64} {
  func.func @_fused_cls_mlp_kernel(%arg0: i32, %arg1: memref<16xi32, #tpu.memory_space<smem>>, %arg2: memref<32x768xf32, #tpu.memory_space<any>>, %arg3: memref<16x1xf32, #tpu.memory_space<vmem>>, %arg4: memref<768x256xbf16, #tpu.memory_space<vmem>>, %arg5: memref<1x256xf32, #tpu.memory_space<vmem>>, %arg6: memref<256x128xbf16, #tpu.memory_space<vmem>>, %arg7: memref<1x128xf32, #tpu.memory_space<vmem>>, %arg8: memref<16x128xf32, #tpu.memory_space<vmem>>, %arg9: memref<16x768xf32, #tpu.memory_space<vmem>>, %arg10: memref<1x!tpu.dma_semaphore, #tpu.memory_space<semaphore_mem>>) attributes {dimension_semantics = [#tpu.dimension_semantics<parallel>], iteration_bounds = array<i64: 1>, scalar_prefetch = 1 : i64, scratch_operands = 2 : i64, tpu.core_type = #tpu.core_type<tc>, window_params = [{}, {transform_indices = @transform_1, window_bounds = array<i64: 16, 1>}, {pipeline_mode = #tpu.pipeline_mode<synchronous>, transform_indices = @transform_2, window_bounds = array<i64: 768, 256>}, {pipeline_mode = #tpu.pipeline_mode<synchronous>, transform_indices = @transform_3, window_bounds = array<i64: 1, 256>}, {pipeline_mode = #tpu.pipeline_mode<synchronous>, transform_indices = @transform_4, window_bounds = array<i64: 256, 128>}, {pipeline_mode = #tpu.pipeline_mode<synchronous>, transform_indices = @transform_5, window_bounds = array<i64: 1, 128>}, {transform_indices = @transform_6, window_bounds = array<i64: 16, 128>}]} {
    %c16_i32 = arith.constant 16 : i32
    %0 = arith.muli %arg0, %c16_i32 : i32
    %c0_i32 = arith.constant 0 : i32
    %c16_i32_0 = arith.constant 16 : i32
    %1 = arith.addi %c0_i32, %c16_i32_0 : i32
    %c1_i32 = arith.constant 1 : i32
    scf.for %arg11 = %c0_i32 to %1 step %c1_i32  : i32 {
      %c1_i32_21 = arith.constant 1 : i32
      %22 = arith.muli %arg11, %c1_i32_21 : i32
      %c0_i32_22 = arith.constant 0 : i32
      %23 = arith.addi %c0_i32_22, %22 : i32
      %24 = arith.addi %0, %23 : i32
      %25 = arith.index_cast %24 : i32 to index
      %26 = memref.load %arg1[%25] : memref<16xi32, #tpu.memory_space<smem>>
      %c0_i32_23 = arith.constant 0 : i32
      %c0_i32_24 = arith.constant 0 : i32
      %27 = tpu.memref_slice %arg2[%26, %c0_i32_24] : memref<32x768xf32, #tpu.memory_space<any>> -> memref<1x768xf32, #tpu.memory_space<any>>
      %28 = tpu.memref_squeeze %27 : memref<1x768xf32, #tpu.memory_space<any>> -> memref<768xf32, #tpu.memory_space<any>>
      %c0_i32_25 = arith.constant 0 : i32
      %29 = tpu.memref_slice %arg9[%23, %c0_i32_25] : memref<16x768xf32, #tpu.memory_space<vmem>> -> memref<1x768xf32, #tpu.memory_space<vmem>>
      %30 = tpu.memref_squeeze %29 : memref<1x768xf32, #tpu.memory_space<vmem>> -> memref<768xf32, #tpu.memory_space<vmem>>
      %31 = tpu.memref_slice %arg10[%c0_i32_23] : memref<1x!tpu.dma_semaphore, #tpu.memory_space<semaphore_mem>> -> memref<1x!tpu.dma_semaphore, #tpu.memory_space<semaphore_mem>>
      %32 = tpu.memref_squeeze %31 : memref<1x!tpu.dma_semaphore, #tpu.memory_space<semaphore_mem>> -> memref<!tpu.dma_semaphore, #tpu.memory_space<semaphore_mem>>
      tpu.enqueue_dma source(%28 : memref<768xf32, #tpu.memory_space<any>>) target(%30 : memref<768xf32, #tpu.memory_space<vmem>>) target_semaphore(%32 : memref<!tpu.dma_semaphore, #tpu.memory_space<semaphore_mem>>)
    }
    %c16_i32_1 = arith.constant 16 : i32
    %c0_i32_2 = arith.constant 0 : i32
    %c16_i32_3 = arith.constant 16 : i32
    %2 = arith.addi %c0_i32_2, %c16_i32_3 : i32
    %c1_i32_4 = arith.constant 1 : i32
    scf.for %arg11 = %c0_i32_2 to %2 step %c1_i32_4  : i32 {
      %c1_i32_21 = arith.constant 1 : i32
      %22 = arith.muli %arg11, %c1_i32_21 : i32
      %c0_i32_22 = arith.constant 0 : i32
      %23 = arith.addi %c0_i32_22, %22 : i32
      %24 = arith.addi %0, %23 : i32
      %25 = arith.index_cast %24 : i32 to index
      %26 = memref.load %arg1[%25] : memref<16xi32, #tpu.memory_space<smem>>
      %c0_i32_23 = arith.constant 0 : i32
      %c0_i32_24 = arith.constant 0 : i32
      %27 = tpu.memref_slice %arg2[%26, %c0_i32_24] : memref<32x768xf32, #tpu.memory_space<any>> -> memref<1x768xf32, #tpu.memory_space<any>>
      %28 = tpu.memref_squeeze %27 : memref<1x768xf32, #tpu.memory_space<any>> -> memref<768xf32, #tpu.memory_space<any>>
      %c0_i32_25 = arith.constant 0 : i32
      %29 = tpu.memref_slice %arg9[%23, %c0_i32_25] : memref<16x768xf32, #tpu.memory_space<vmem>> -> memref<1x768xf32, #tpu.memory_space<vmem>>
      %30 = tpu.memref_squeeze %29 : memref<1x768xf32, #tpu.memory_space<vmem>> -> memref<768xf32, #tpu.memory_space<vmem>>
      %31 = tpu.memref_slice %arg10[%c0_i32_23] : memref<1x!tpu.dma_semaphore, #tpu.memory_space<semaphore_mem>> -> memref<1x!tpu.dma_semaphore, #tpu.memory_space<semaphore_mem>>
      %32 = tpu.memref_squeeze %31 : memref<1x!tpu.dma_semaphore, #tpu.memory_space<semaphore_mem>> -> memref<!tpu.dma_semaphore, #tpu.memory_space<semaphore_mem>>
      tpu.wait_dma2 semaphore(%32 : memref<!tpu.dma_semaphore, #tpu.memory_space<semaphore_mem>>) src(%28 : memref<768xf32, #tpu.memory_space<any>>) dst(%30 : memref<768xf32, #tpu.memory_space<vmem>>)
    }
    %c16_i32_5 = arith.constant 16 : i32
    %c0 = arith.constant 0 : index
    %c0_6 = arith.constant 0 : index
    %3 = vector.load %arg9[%c0, %c0_6] : memref<16x768xf32, #tpu.memory_space<vmem>>, vector<16x768xf32>
    %c0_7 = arith.constant 0 : index
    %c0_8 = arith.constant 0 : index
    %4 = vector.load %arg3[%c0_7, %c0_8] : memref<16x1xf32, #tpu.memory_space<vmem>>, vector<16x1xf32>
    %5 = vector.broadcast %4 : vector<16x1xf32> to vector<16x768xf32>
    %6 = arith.mulf %3, %5 : vector<16x768xf32>
    %7 = arith.truncf %6 : vector<16x768xf32> to vector<16x768xbf16>
    %c0_9 = arith.constant 0 : index
    %c0_10 = arith.constant 0 : index
    %8 = vector.load %arg4[%c0_9, %c0_10] : memref<768x256xbf16, #tpu.memory_space<vmem>>, vector<768x256xbf16>
    %cst = arith.constant dense<0.000000e+00> : vector<16x256xf32>
    %9 = tpu.matmul %7, %8, %cst {dimension_numbers = #tpu.dot_dimension_numbers<[1], [0], [0], [1], [0, 0, 1, 1], [], []>} : vector<16x768xbf16>, vector<768x256xbf16>, vector<16x256xf32> -> vector<16x256xf32>
    %c0_11 = arith.constant 0 : index
    %c0_12 = arith.constant 0 : index
    %10 = vector.load %arg5[%c0_11, %c0_12] : memref<1x256xf32, #tpu.memory_space<vmem>>, vector<1x256xf32>
    %11 = vector.broadcast %10 : vector<1x256xf32> to vector<16x256xf32>
    %12 = arith.addf %9, %11 : vector<16x256xf32>
    %cst_13 = arith.constant 0.000000e+00 : f32
    %13 = vector.broadcast %cst_13 : f32 to vector<16x256xf32>
    %14 = arith.maximumf %12, %13 : vector<16x256xf32>
    %15 = arith.truncf %14 : vector<16x256xf32> to vector<16x256xbf16>
    %c0_14 = arith.constant 0 : index
    %c0_15 = arith.constant 0 : index
    %16 = vector.load %arg6[%c0_14, %c0_15] : memref<256x128xbf16, #tpu.memory_space<vmem>>, vector<256x128xbf16>
    %cst_16 = arith.constant dense<0.000000e+00> : vector<16x128xf32>
    %17 = tpu.matmul %15, %16, %cst_16 {dimension_numbers = #tpu.dot_dimension_numbers<[1], [0], [0], [1], [0, 0, 1, 1], [], []>} : vector<16x256xbf16>, vector<256x128xbf16>, vector<16x128xf32> -> vector<16x128xf32>
    %c0_17 = arith.constant 0 : index
    %c0_18 = arith.constant 0 : index
    %18 = vector.load %arg7[%c0_17, %c0_18] : memref<1x128xf32, #tpu.memory_space<vmem>>, vector<1x128xf32>
    %19 = vector.broadcast %18 : vector<1x128xf32> to vector<16x128xf32>
    %20 = arith.addf %17, %19 : vector<16x128xf32>
    %c0_19 = arith.constant 0 : index
    %c0_20 = arith.constant 0 : index
    %21 = vector.load %arg8[%c0_19, %c0_20] : memref<16x128xf32, #tpu.memory_space<vmem>>, vector<16x128xf32>
    tpu.vector_store %arg8[%c0_19, %c0_20], %20 {strides = array<i32>} : memref<16x128xf32, #tpu.memory_space<vmem>>, vector<16x128xf32>,
    return
  }
  func.func @transform_1(%arg0: i32, %arg1: memref<16xi32, #tpu.memory_space<smem>>) -> (i32, i32) {
    %c0_i32 = arith.constant 0 : i32
    %c0_i32_0 = arith.constant 0 : i32
    return %arg0, %c0_i32 : i32, i32
  }
  func.func @transform_2(%arg0: i32, %arg1: memref<16xi32, #tpu.memory_space<smem>>) -> (i32, i32) {
    %c0_i32 = arith.constant 0 : i32
    %c0_i32_0 = arith.constant 0 : i32
    %c0_i32_1 = arith.constant 0 : i32
    return %c0_i32, %c0_i32_0 : i32, i32
  }
  func.func @transform_3(%arg0: i32, %arg1: memref<16xi32, #tpu.memory_space<smem>>) -> (i32, i32) {
    %c0_i32 = arith.constant 0 : i32
    %c0_i32_0 = arith.constant 0 : i32
    %c0_i32_1 = arith.constant 0 : i32
    return %c0_i32, %c0_i32_0 : i32, i32
  }
  func.func @transform_4(%arg0: i32, %arg1: memref<16xi32, #tpu.memory_space<smem>>) -> (i32, i32) {
    %c0_i32 = arith.constant 0 : i32
    %c0_i32_0 = arith.constant 0 : i32
    %c0_i32_1 = arith.constant 0 : i32
    return %c0_i32, %c0_i32_0 : i32, i32
  }
  func.func @transform_5(%arg0: i32, %arg1: memref<16xi32, #tpu.memory_space<smem>>) -> (i32, i32) {
    %c0_i32 = arith.constant 0 : i32
    %c0_i32_0 = arith.constant 0 : i32
    %c0_i32_1 = arith.constant 0 : i32
    return %c0_i32, %c0_i32_0 : i32, i32
  }
  func.func @transform_6(%arg0: i32, %arg1: memref<16xi32, #tpu.memory_space<smem>>) -> (i32, i32) {
    %c0_i32 = arith.constant 0 : i32
    %c0_i32_0 = arith.constant 0 : i32
    return %arg0, %c0_i32 : i32, i32
  }
}

</mosaic_0001>

<llo_original>
// kernel: bert_mlp_classifier_forward.1
$region0: #{bert_mlp_classifier_forward.1}
  #allocation0 [shape = 'u32[]', space=smem, size = 0x4, offset = 0x4, fixed_abs, tag = 'smem constant byte address 0x4 - core index']
  #allocation1 [shape = 'u32[72,128]{1,0:T(1,128)}', space=vmem, size = 0x9000, scoped, tag = 'internal scratch']
  #allocation2 [shape = 'f32[16,768]{1,0:T(8,128)}', space=vmem, size = 0xc000, scoped, tag = 'scratch operand']
  #allocation3 [shape = 's32[1]{0}', space=sflag, size = 0x4, scoped, tag = 'scratch operand']
  #allocation4 [shape = 's32[1]{0}', space=sflag, size = 0x4, scoped, tag = 'scoped memory for bert_mlp_classifier_forward.1']
  #allocation5 [shape = 'u8[512]{0}', space=smem, size = 0x200, scoped, tag = 'prefetched SMEM operand 0']
  #allocation10 [shape = 's32[]', space=sflag, size = 0x4, offset = 0, fixed_abs, tag = 'sflag constant byte address 0x0 - dummy sync flag']
  %s0 = inlined_call_operand.vmem [shape: s32[16], index: 0, kind: input, shape index: {}]
  %s1 = inlined_call_operand.hbm [shape: f32[32,768], index: 1, kind: input, shape index: {}]
  %s2 = inlined_call_operand.vmem [shape: f32[16,1], index: 2, kind: input, shape index: {}]
  %s3 = inlined_call_operand.hbm [shape: bf16[768,256], index: 3, kind: input, shape index: {}]
  %s4 = inlined_call_operand.vmem [shape: f32[1,256], index: 4, kind: input, shape index: {}]
  %s5 = inlined_call_operand.hbm [shape: bf16[256,128], index: 5, kind: input, shape index: {}]
  %s6 = inlined_call_operand.vmem [shape: f32[1,128], index: 6, kind: input, shape index: {}]
  %s7 = inlined_call_operand.vmem [shape: f32[16,128], index: 7, kind: output, shape index: {}]
  %s8 = sld [smem:[#allocation0]]
  $region52: #{bert_mlp_classifier_forward.1} parent=0
    _
  %s10 = ssub.s32 1, %s8
  %s11 = scalar_select 0, %s10, %s8
  %s13 = sshll.u32 %s0, 4
  %s14 = int_to_ptr.vmem [resolvable:$true] %s13
  %16 = dma.vmem_to_smem %s14, 16, [#allocation5], [#allocation4]
  %18 = dma.done [#allocation4], 16
  %19 = sfence
  $region1: #{bert_mlp_classifier_forward.1} parent=0
    #allocation6 [shape = 'u8[393216]{0}', space=vmem, size = 0x60000, scoped, tag = 'input window, operand 3, single buffered']
    #allocation7 [shape = 's32[1]{0}', space=sflag, size = 0x4, scoped, tag = 'scoped memory for bert_mlp_classifier_forward.1']
    #allocation8 [shape = 'u8[65536]{0}', space=vmem, size = 0x10000, scoped, tag = 'input window, operand 5, single buffered']
    #allocation9 [shape = 's32[1]{0}', space=sflag, size = 0x4, scoped, tag = 'scoped memory for bert_mlp_classifier_forward.1']
    %20 = vsyncpa [#allocation7], 0
    %21 = vsyncpa [#allocation9], 0
    // Predicated region
    $region2: #{bert_mlp_classifier_forward.1} parent=1 // pred_check
      _
    $region3: #{bert_mlp_classifier_forward.1} parent=1 // pred_check_branch
      %23 = sbr.rel (0) target = $region5
    $region4: #{bert_mlp_classifier_forward.1} parent=1 // pred_region
      _
    $region5: #{bert_mlp_classifier_forward.1} parent=1 // pred_fallthru
      _
    // Predicated region
    $region6: #{bert_mlp_classifier_forward.1} parent=1 // pred_check
      _
    $region7: #{bert_mlp_classifier_forward.1} parent=1 // pred_check_branch
      %25 = sbr.rel (0) target = $region9
    $region8: #{bert_mlp_classifier_forward.1} parent=1 // pred_region
      %27 = vsyncadd [#allocation7], 0
      %s28 = sshll.u32 %s3, 4
      %s29 = int_to_ptr.hbm [resolvable:$true] %s28
      %s30 = sshll.u32 [#allocation6], 4
      %s31 = int_to_ptr.vmem [resolvable:$true] %s30
      %36 = dma.hbm_to_vmem [thread:$0]  %s29, 12288, %s31, [#allocation7], 128, 128, 8
    $region9: #{bert_mlp_classifier_forward.1} parent=1 // pred_fallthru
      _
    // Predicated region
    $region10: #{bert_mlp_classifier_forward.1} parent=1 // pred_check
      _
    $region11: #{bert_mlp_classifier_forward.1} parent=1 // pred_check_branch
      %38 = sbr.rel (0) target = $region13
    $region12: #{bert_mlp_classifier_forward.1} parent=1 // pred_region
      _
    $region13: #{bert_mlp_classifier_forward.1} parent=1 // pred_fallthru
      _
    // Predicated region
    $region14: #{bert_mlp_classifier_forward.1} parent=1 // pred_check
      _
    $region15: #{bert_mlp_classifier_forward.1} parent=1 // pred_check_branch
      %40 = sbr.rel (0) target = $region17
    $region16: #{bert_mlp_classifier_forward.1} parent=1 // pred_region
      %42 = vsyncadd [#allocation9], 0
      %s43 = sshll.u32 %s5, 4
      %s44 = int_to_ptr.hbm [resolvable:$true] %s43
      %s45 = sshll.u32 [#allocation8], 4
      %s46 = int_to_ptr.vmem [resolvable:$true] %s45
      %51 = dma.hbm_to_vmem [thread:$0]  %s44, 2048, %s46, [#allocation9], 64, 64, 4
    $region17: #{bert_mlp_classifier_forward.1} parent=1 // pred_fallthru
      _
    // Predicated region
    $region18: #{bert_mlp_classifier_forward.1} parent=1 // pred_check
      _
    $region19: #{bert_mlp_classifier_forward.1} parent=1 // pred_check_branch
      %53 = sbr.rel (0) target = $region21
    $region20: #{bert_mlp_classifier_forward.1} parent=1 // pred_region
      _
    $region21: #{bert_mlp_classifier_forward.1} parent=1 // pred_fallthru
      _
    // Predicated region
    $region22: #{bert_mlp_classifier_forward.1} parent=1 // pred_check
      _
    $region23: #{bert_mlp_classifier_forward.1} parent=1 // pred_check_branch
      %55 = sbr.rel (0) target = $region25
    $region24: #{bert_mlp_classifier_forward.1} parent=1 // pred_region
      %57 = dma.done [#allocation7], 12288
    $region25: #{bert_mlp_classifier_forward.1} parent=1 // pred_fallthru
      _
    // Predicated region
    $region26: #{bert_mlp_classifier_forward.1} parent=1 // pred_check
      _
    $region27: #{bert_mlp_classifier_forward.1} parent=1 // pred_check_branch
      %59 = sbr.rel (0) target = $region29
    $region28: #{bert_mlp_classifier_forward.1} parent=1 // pred_region
      %61 = dma.done [#allocation9], 2048
    $region29: #{bert_mlp_classifier_forward.1} parent=1 // pred_fallthru
      _
    %s62 = smul.u32 0, 16
    loop: start=0, step=1, limit=16
    $region30: #{bert_mlp_classifier_forward.1} parent=1 // loop_pre_header
      _
    $region31: #{bert_mlp_classifier_forward.1} parent=1 // loop_header
      %s64 = sphi 0, %s68
      %p65 = scmp.ge.s32.totalorder %s64, 16
    $region32: #{bert_mlp_classifier_forward.1} parent=1 // loop_header_branch
      %67 = sbr.rel (%p65) target = $region36
    $region33: #{bert_mlp_classifier_forward.1} parent=1 // loop_body
      %s69 = sadd.s32 %s62, %s64
      %s70 = sld [smem:[#allocation5 + %s69]]
      %s71 = sshrl.u32 %s70, 3
      %s72 = sand.u32 %s70, 7
      %s73 = smul.u32 %s71, 48
      %s74 = sadd.s32 %s72, %s73
      %s75 = scalar_lea.hbm %s1, %s74
      %s76 = sshrl.u32 %s64, 3
      %s77 = sand.u32 %s64, 7
      %s78 = smul.u32 %s76, 48
      %s79 = sadd.s32 %s77, %s78
      %s80 = scalar_lea.vmem [#allocation2], %s79
      %s81 = sshll.u32 %s75, 4
      %s82 = int_to_ptr.hbm [resolvable:$true] %s81
      %s83 = sshll.u32 %s80, 4
      %s84 = int_to_ptr.vmem [resolvable:$true] %s83
      %88 = dma.hbm_to_vmem [thread:$0]  %s82, 96, %s84, [#allocation3], 128, 128, 1
    $region34: #{bert_mlp_classifier_forward.1} parent=1 // loop_footer
      %s68 = sadd.s32 1, %s64
    $region35: #{bert_mlp_classifier_forward.1} parent=1 // loop_footer_branch
      %63 = sbr.rel target = $region31
    $region36: #{bert_mlp_classifier_forward.1} parent=1 // loop_exit
      _
    loop: start=0, step=1, limit=16
    $region37: #{bert_mlp_classifier_forward.1} parent=1 // loop_pre_header
      _
    $region38: #{bert_mlp_classifier_forward.1} parent=1 // loop_header
      %s90 = sphi 0, %s94
      %p91 = scmp.ge.s32.totalorder %s90, 16
    $region39: #{bert_mlp_classifier_forward.1} parent=1 // loop_header_branch
      %93 = sbr.rel (%p91) target = $region43
    $region40: #{bert_mlp_classifier_forward.1} parent=1 // loop_body
      %s95 = sadd.s32 %s62, %s90
      %s96 = sld [smem:[#allocation5 + %s95]]
      %98 = dma.done [#allocation3], 96
    $region41: #{bert_mlp_classifier_forward.1} parent=1 // loop_footer
      %s94 = sadd.s32 1, %s90
    $region42: #{bert_mlp_classifier_forward.1} parent=1 // loop_footer_branch
      %89 = sbr.rel target = $region38
    $region43: #{bert_mlp_classifier_forward.1} parent=1 // loop_exit
      _
    %v99 = vld [vmem:[#allocation2] sm:$0xff]
    %v100 = vld [vmem:[#allocation2 + $0x8] sm:$0xff]
    %v101 = vld [vmem:[#allocation2 + $0x10] sm:$0xff]
    %v102 = vld [vmem:[#allocation2 + $0x18] sm:$0xff]
    %v103 = vld [vmem:[#allocation2 + $0x20] sm:$0xff]
    %v104 = vld [vmem:[#allocation2 + $0x28] sm:$0xff]
    %v105 = vld [vmem:[#allocation2 + $0x30] sm:$0xff]
    %v106 = vld [vmem:[#allocation2 + $0x38] sm:$0xff]
    %v107 = vld [vmem:[#allocation2 + $0x40] sm:$0xff]
    %v108 = vld [vmem:[#allocation2 + $0x48] sm:$0xff]
    %v109 = vld [vmem:[#allocation2 + $0x50] sm:$0xff]
    %v110 = vld [vmem:[#allocation2 + $0x58] sm:$0xff]
    %v111 = vld [vmem:[%s2] sm:$0xff]
    %v112 = vld [vmem:[%s2 + $0x8] sm:$0xff]
    %114 = vset.pattern.permute.xlu0 0
    %115 = vperm.xlu0 %114, %v111
    %v116 = vpop.permute.xlu0 %115
    %119 = vset.pattern.permute.xlu0 0
    %120 = vperm.xlu0 %119, %v112
    %v121 = vpop.permute.xlu0 %120
    %v123 = vmul.f32 %v99, %v116
    %v124 = vmul.f32 %v100, %v116
    %v125 = vmul.f32 %v101, %v116
    %v126 = vmul.f32 %v102, %v116
    %v127 = vmul.f32 %v103, %v116
    %v128 = vmul.f32 %v104, %v116
    %v129 = vmul.f32 %v105, %v121
    %v130 = vmul.f32 %v106, %v121
    %v131 = vmul.f32 %v107, %v121
    %v132 = vmul.f32 %v108, %v121
    %v133 = vmul.f32 %v109, %v121
    %v134 = vmul.f32 %v110, %v121
    %v135 = vpack.c.bf16 %v129, %v123
    %v136 = vpack.c.bf16 %v130, %v124
    %v137 = vpack.c.bf16 %v131, %v125
    %v138 = vpack.c.bf16 %v132, %v126
    %v139 = vpack.c.bf16 %v133, %v127
    %v140 = vpack.c.bf16 %v134, %v128
    %v141 = vld [vmem:[#allocation6] sm:$0xff]
    %v142 = vld [vmem:[#allocation6 + $0x8] sm:$0xff]
    %v143 = vld [vmem:[#allocation6 + $0x10] sm:$0xff]
    %v144 = vld [vmem:[#allocation6 + $0x18] sm:$0xff]
    %v145 = vld [vmem:[#allocation6 + $0x20] sm:$0xff]
    %v146 = vld [vmem:[#allocation6 + $0x28] sm:$0xff]
    %v147 = vld [vmem:[#allocation6 + $0x30] sm:$0xff]
    %v148 = vld [vmem:[#allocation6 + $0x38] sm:$0xff]
    %v149 = vld [vmem:[#allocation6 + $0x40] sm:$0xff]
    %v150 = vld [vmem:[#allocation6 + $0x48] sm:$0xff]
    %v151 = vld [vmem:[#allocation6 + $0x50] sm:$0xff]
    %v152 = vld [vmem:[#allocation6 + $0x58] sm:$0xff]
    %v153 = vld [vmem:[#allocation6 + $0x60] sm:$0xff]
    %v154 = vld [vmem:[#allocation6 + $0x68] sm:$0xff]
    %v155 = vld [vmem:[#allocation6 + $0x70] sm:$0xff]
    %v156 = vld [vmem:[#allocation6 + $0x78] sm:$0xff]
    %v157 = vld [vmem:[#allocation6 + $0x80] sm:$0xff]
    %v158 = vld [vmem:[#allocation6 + $0x88] sm:$0xff]
    %v159 = vld [vmem:[#allocation6 + $0x90] sm:$0xff]
    %v160 = vld [vmem:[#allocation6 + $0x98] sm:$0xff]
    %v161 = vld [vmem:[#allocation6 + $0xa0] sm:$0xff]
    %v162 = vld [vmem:[#allocation6 + $0xa8] sm:$0xff]
    %v163 = vld [vmem:[#allocation6 + $0xb0] sm:$0xff]
    %v164 = vld [vmem:[#allocation6 + $0xb8] sm:$0xff]
    %v165 = vld [vmem:[#allocation6 + $0xc0] sm:$0xff]
    %v166 = vld [vmem:[#allocation6 + $0xc8] sm:$0xff]
    %v167 = vld [vmem:[#allocation6 + $0xd0] sm:$0xff]
    %v168 = vld [vmem:[#allocation6 + $0xd8] sm:$0xff]
    %v169 = vld [vmem:[#allocation6 + $0xe0] sm:$0xff]
    %v170 = vld [vmem:[#allocation6 + $0xe8] sm:$0xff]
    %v171 = vld [vmem:[#allocation6 + $0xf0] sm:$0xff]
    %v172 = vld [vmem:[#allocation6 + $0xf8] sm:$0xff]
    %v173 = vld [vmem:[#allocation6 + $0x100] sm:$0xff]
    %v174 = vld [vmem:[#allocation6 + $0x108] sm:$0xff]
    %v175 = vld [vmem:[#allocation6 + $0x110] sm:$0xff]
    %v176 = vld [vmem:[#allocation6 + $0x118] sm:$0xff]
    %v177 = vld [vmem:[#allocation6 + $0x120] sm:$0xff]
    %v178 = vld [vmem:[#allocation6 + $0x128] sm:$0xff]
    %v179 = vld [vmem:[#allocation6 + $0x130] sm:$0xff]
    %v180 = vld [vmem:[#allocation6 + $0x138] sm:$0xff]
    %v181 = vld [vmem:[#allocation6 + $0x140] sm:$0xff]
    %v182 = vld [vmem:[#allocation6 + $0x148] sm:$0xff]
    %v183 = vld [vmem:[#allocation6 + $0x150] sm:$0xff]
    %v184 = vld [vmem:[#allocation6 + $0x158] sm:$0xff]
    %v185 = vld [vmem:[#allocation6 + $0x160] sm:$0xff]
    %v186 = vld [vmem:[#allocation6 + $0x168] sm:$0xff]
    %v187 = vld [vmem:[#allocation6 + $0x170] sm:$0xff]
    %v188 = vld [vmem:[#allocation6 + $0x178] sm:$0xff]
    %v189 = vld [vmem:[#allocation6 + $0x180] sm:$0xff]
    %v190 = vld [vmem:[#allocation6 + $0x188] sm:$0xff]
    %v191 = vld [vmem:[#allocation6 + $0x190] sm:$0xff]
    %v192 = vld [vmem:[#allocation6 + $0x198] sm:$0xff]
    %v193 = vld [vmem:[#allocation6 + $0x1a0] sm:$0xff]
    %v194 = vld [vmem:[#allocation6 + $0x1a8] sm:$0xff]
    %v195 = vld [vmem:[#allocation6 + $0x1b0] sm:$0xff]
    %v196 = vld [vmem:[#allocation6 + $0x1b8] sm:$0xff]
    %v197 = vld [vmem:[#allocation6 + $0x1c0] sm:$0xff]
    %v198 = vld [vmem:[#allocation6 + $0x1c8] sm:$0xff]
    %v199 = vld [vmem:[#allocation6 + $0x1d0] sm:$0xff]
    %v200 = vld [vmem:[#allocation6 + $0x1d8] sm:$0xff]
    %v201 = vld [vmem:[#allocation6 + $0x1e0] sm:$0xff]
    %v202 = vld [vmem:[#allocation6 + $0x1e8] sm:$0xff]
    %v203 = vld [vmem:[#allocation6 + $0x1f0] sm:$0xff]
    %v204 = vld [vmem:[#allocation6 + $0x1f8] sm:$0xff]
    %v205 = vld [vmem:[#allocation6 + $0x200] sm:$0xff]
    %v206 = vld [vmem:[#allocation6 + $0x208] sm:$0xff]
    %v207 = vld [vmem:[#allocation6 + $0x210] sm:$0xff]
    %v208 = vld [vmem:[#allocation6 + $0x218] sm:$0xff]
    %v209 = vld [vmem:[#allocation6 + $0x220] sm:$0xff]
    %v210 = vld [vmem:[#allocation6 + $0x228] sm:$0xff]
    %v211 = vld [vmem:[#allocation6 + $0x230] sm:$0xff]
    %v212 = vld [vmem:[#allocation6 + $0x238] sm:$0xff]
    %v213 = vld [vmem:[#allocation6 + $0x240] sm:$0xff]
    %v214 = vld [vmem:[#allocation6 + $0x248] sm:$0xff]
    %v215 = vld [vmem:[#allocation6 + $0x250] sm:$0xff]
    %v216 = vld [vmem:[#allocation6 + $0x258] sm:$0xff]
    %v217 = vld [vmem:[#allocation6 + $0x260] sm:$0xff]
    %v218 = vld [vmem:[#allocation6 + $0x268] sm:$0xff]
    %v219 = vld [vmem:[#allocation6 + $0x270] sm:$0xff]
    %v220 = vld [vmem:[#allocation6 + $0x278] sm:$0xff]
    %v221 = vld [vmem:[#allocation6 + $0x280] sm:$0xff]
    %v222 = vld [vmem:[#allocation6 + $0x288] sm:$0xff]
    %v223 = vld [vmem:[#allocation6 + $0x290] sm:$0xff]
    %v224 = vld [vmem:[#allocation6 + $0x298] sm:$0xff]
    %v225 = vld [vmem:[#allocation6 + $0x2a0] sm:$0xff]
    %v226 = vld [vmem:[#allocation6 + $0x2a8] sm:$0xff]
    %v227 = vld [vmem:[#allocation6 + $0x2b0] sm:$0xff]
    %v228 = vld [vmem:[#allocation6 + $0x2b8] sm:$0xff]
    %v229 = vld [vmem:[#allocation6 + $0x2c0] sm:$0xff]
    %v230 = vld [vmem:[#allocation6 + $0x2c8] sm:$0xff]
    %v231 = vld [vmem:[#allocation6 + $0x2d0] sm:$0xff]
    %v232 = vld [vmem:[#allocation6 + $0x2d8] sm:$0xff]
    %v233 = vld [vmem:[#allocation6 + $0x2e0] sm:$0xff]
    %v234 = vld [vmem:[#allocation6 + $0x2e8] sm:$0xff]
    %v235 = vld [vmem:[#allocation6 + $0x2f0] sm:$0xff]
    %v236 = vld [vmem:[#allocation6 + $0x2f8] sm:$0xff]
    %v237 = vld [vmem:[%s4] sm:$0x3]
    %v239 = vperm.slane %v237, 0
    %v240 = vperm.slane %v237, 1
    %v339 = vunpack.c.l.b16 %v141
    %v340 = vunpack.c.h.b16 %v141
    %v341 = vunpack.c.l.b16 %v142
    %v342 = vunpack.c.h.b16 %v142
    %v343 = vunpack.c.l.b16 %v143
    %v344 = vunpack.c.h.b16 %v143
    %v345 = vunpack.c.l.b16 %v144
    %v346 = vunpack.c.h.b16 %v144
    %v347 = vunpack.c.l.b16 %v145
    %v348 = vunpack.c.h.b16 %v145
    %v349 = vunpack.c.l.b16 %v146
    %v350 = vunpack.c.h.b16 %v146
    %v351 = vunpack.c.l.b16 %v147
    %v352 = vunpack.c.h.b16 %v147
    %v353 = vunpack.c.l.b16 %v148
    %v354 = vunpack.c.h.b16 %v148
    %v355 = vunpack.c.l.b16 %v149
    %v356 = vunpack.c.h.b16 %v149
    %v357 = vunpack.c.l.b16 %v150
    %v358 = vunpack.c.h.b16 %v150
    %v359 = vunpack.c.l.b16 %v151
    %v360 = vunpack.c.h.b16 %v151
    %v361 = vunpack.c.l.b16 %v152
    %v362 = vunpack.c.h.b16 %v152
    %v363 = vunpack.c.l.b16 %v153
    %v364 = vunpack.c.h.b16 %v153
    %v365 = vunpack.c.l.b16 %v154
    %v366 = vunpack.c.h.b16 %v154
    %v367 = vunpack.c.l.b16 %v155
    %v368 = vunpack.c.h.b16 %v155
    %v369 = vunpack.c.l.b16 %v156
    %v370 = vunpack.c.h.b16 %v156
    %v371 = vunpack.c.l.b16 %v157
    %v372 = vunpack.c.h.b16 %v157
    %v373 = vunpack.c.l.b16 %v158
    %v374 = vunpack.c.h.b16 %v158
    %v375 = vunpack.c.l.b16 %v159
    %v376 = vunpack.c.h.b16 %v159
    %v377 = vunpack.c.l.b16 %v160
    %v378 = vunpack.c.h.b16 %v160
    %v379 = vunpack.c.l.b16 %v161
    %v380 = vunpack.c.h.b16 %v161
    %v381 = vunpack.c.l.b16 %v162
    %v382 = vunpack.c.h.b16 %v162
    %v383 = vunpack.c.l.b16 %v163
    %v384 = vunpack.c.h.b16 %v163
    %v385 = vunpack.c.l.b16 %v164
    %v386 = vunpack.c.h.b16 %v164
    %v387 = vunpack.c.l.b16 %v165
    %v388 = vunpack.c.h.b16 %v165
    %v389 = vunpack.c.l.b16 %v166
    %v390 = vunpack.c.h.b16 %v166
    %v391 = vunpack.c.l.b16 %v167
    %v392 = vunpack.c.h.b16 %v167
    %v393 = vunpack.c.l.b16 %v168
    %v394 = vunpack.c.h.b16 %v168
    %v395 = vunpack.c.l.b16 %v169
    %v396 = vunpack.c.h.b16 %v169
    %v397 = vunpack.c.l.b16 %v170
    %v398 = vunpack.c.h.b16 %v170
    %v399 = vunpack.c.l.b16 %v171
    %v400 = vunpack.c.h.b16 %v171
    %v401 = vunpack.c.l.b16 %v172
    %v402 = vunpack.c.h.b16 %v172
    %v403 = vunpack.c.l.b16 %v173
    %v404 = vunpack.c.h.b16 %v173
    %v405 = vunpack.c.l.b16 %v174
    %v406 = vunpack.c.h.b16 %v174
    %v407 = vunpack.c.l.b16 %v175
    %v408 = vunpack.c.h.b16 %v175
    %v409 = vunpack.c.l.b16 %v176
    %v410 = vunpack.c.h.b16 %v176
    %v411 = vunpack.c.l.b16 %v177
    %v412 = vunpack.c.h.b16 %v177
    %v413 = vunpack.c.l.b16 %v178
    %v414 = vunpack.c.h.b16 %v178
    %v415 = vunpack.c.l.b16 %v179
    %v416 = vunpack.c.h.b16 %v179
    %v417 = vunpack.c.l.b16 %v180
    %v418 = vunpack.c.h.b16 %v180
    %v419 = vunpack.c.l.b16 %v181
    %v420 = vunpack.c.h.b16 %v181
    %v421 = vunpack.c.l.b16 %v182
    %v422 = vunpack.c.h.b16 %v182
    %v423 = vunpack.c.l.b16 %v183
    %v424 = vunpack.c.h.b16 %v183
    %v425 = vunpack.c.l.b16 %v184
    %v426 = vunpack.c.h.b16 %v184
    %v427 = vunpack.c.l.b16 %v185
    %v428 = vunpack.c.h.b16 %v185
    %v429 = vunpack.c.l.b16 %v186
    %v430 = vunpack.c.h.b16 %v186
    %v431 = vunpack.c.l.b16 %v187
    %v432 = vunpack.c.h.b16 %v187
    %v433 = vunpack.c.l.b16 %v188
    %v434 = vunpack.c.h.b16 %v188
    %v435 = vunpack.c.l.b16 %v189
    %v436 = vunpack.c.h.b16 %v189
    %v437 = vunpack.c.l.b16 %v190
    %v438 = vunpack.c.h.b16 %v190
    %v439 = vunpack.c.l.b16 %v191
    %v440 = vunpack.c.h.b16 %v191
    %v441 = vunpack.c.l.b16 %v192
    %v442 = vunpack.c.h.b16 %v192
    %v443 = vunpack.c.l.b16 %v193
    %v444 = vunpack.c.h.b16 %v193
    %v445 = vunpack.c.l.b16 %v194
    %v446 = vunpack.c.h.b16 %v194
    %v447 = vunpack.c.l.b16 %v195
    %v448 = vunpack.c.h.b16 %v195
    %v449 = vunpack.c.l.b16 %v196
    %v450 = vunpack.c.h.b16 %v196
    %v451 = vunpack.c.l.b16 %v197
    %v452 = vunpack.c.h.b16 %v197
    %v453 = vunpack.c.l.b16 %v198
    %v454 = vunpack.c.h.b16 %v198
    %v455 = vunpack.c.l.b16 %v199
    %v456 = vunpack.c.h.b16 %v199
    %v457 = vunpack.c.l.b16 %v200
    %v458 = vunpack.c.h.b16 %v200
    %v459 = vunpack.c.l.b16 %v201
    %v460 = vunpack.c.h.b16 %v201
    %v461 = vunpack.c.l.b16 %v202
    %v462 = vunpack.c.h.b16 %v202
    %v463 = vunpack.c.l.b16 %v203
    %v464 = vunpack.c.h.b16 %v203
    %v465 = vunpack.c.l.b16 %v204
    %v466 = vunpack.c.h.b16 %v204
    %v467 = vunpack.c.l.b16 %v205
    %v468 = vunpack.c.h.b16 %v205
    %v469 = vunpack.c.l.b16 %v206
    %v470 = vunpack.c.h.b16 %v206
    %v471 = vunpack.c.l.b16 %v207
    %v472 = vunpack.c.h.b16 %v207
    %v473 = vunpack.c.l.b16 %v208
    %v474 = vunpack.c.h.b16 %v208
    %v475 = vunpack.c.l.b16 %v209
    %v476 = vunpack.c.h.b16 %v209
    %v477 = vunpack.c.l.b16 %v210
    %v478 = vunpack.c.h.b16 %v210
    %v479 = vunpack.c.l.b16 %v211
    %v480 = vunpack.c.h.b16 %v211
    %v481 = vunpack.c.l.b16 %v212
    %v482 = vunpack.c.h.b16 %v212
    %v483 = vunpack.c.l.b16 %v213
    %v484 = vunpack.c.h.b16 %v213
    %v485 = vunpack.c.l.b16 %v214
    %v486 = vunpack.c.h.b16 %v214
    %v487 = vunpack.c.l.b16 %v215
    %v488 = vunpack.c.h.b16 %v215
    %v489 = vunpack.c.l.b16 %v216
    %v490 = vunpack.c.h.b16 %v216
    %v491 = vunpack.c.l.b16 %v217
    %v492 = vunpack.c.h.b16 %v217
    %v493 = vunpack.c.l.b16 %v218
    %v494 = vunpack.c.h.b16 %v218
    %v495 = vunpack.c.l.b16 %v219
    %v496 = vunpack.c.h.b16 %v219
    %v497 = vunpack.c.l.b16 %v220
    %v498 = vunpack.c.h.b16 %v220
    %v499 = vunpack.c.l.b16 %v221
    %v500 = vunpack.c.h.b16 %v221
    %v501 = vunpack.c.l.b16 %v222
    %v502 = vunpack.c.h.b16 %v222
    %v503 = vunpack.c.l.b16 %v223
    %v504 = vunpack.c.h.b16 %v223
    %v505 = vunpack.c.l.b16 %v224
    %v506 = vunpack.c.h.b16 %v224
    %v507 = vunpack.c.l.b16 %v225
    %v508 = vunpack.c.h.b16 %v225
    %v509 = vunpack.c.l.b16 %v226
    %v510 = vunpack.c.h.b16 %v226
    %v511 = vunpack.c.l.b16 %v227
    %v512 = vunpack.c.h.b16 %v227
    %v513 = vunpack.c.l.b16 %v228
    %v514 = vunpack.c.h.b16 %v228
    %v515 = vunpack.c.l.b16 %v229
    %v516 = vunpack.c.h.b16 %v229
    %v517 = vunpack.c.l.b16 %v230
    %v518 = vunpack.c.h.b16 %v230
    %v519 = vunpack.c.l.b16 %v231
    %v520 = vunpack.c.h.b16 %v231
    %v521 = vunpack.c.l.b16 %v232
    %v522 = vunpack.c.h.b16 %v232
    %v523 = vunpack.c.l.b16 %v233
    %v524 = vunpack.c.h.b16 %v233
    %v525 = vunpack.c.l.b16 %v234
    %v526 = vunpack.c.h.b16 %v234
    %v527 = vunpack.c.l.b16 %v235
    %v528 = vunpack.c.h.b16 %v235
    %v529 = vunpack.c.l.b16 %v236
    %v530 = vunpack.c.h.b16 %v236
    %v531 = vpack.c.b16 %v341, %v339
    %v532 = vpack.c.b16 %v342, %v340
    %v533 = vpack.c.b16 %v345, %v343
    %v534 = vpack.c.b16 %v346, %v344
    %v535 = vpack.c.b16 %v349, %v347
    %v536 = vpack.c.b16 %v350, %v348
    %v537 = vpack.c.b16 %v353, %v351
    %v538 = vpack.c.b16 %v354, %v352
    %v539 = vpack.c.b16 %v357, %v355
    %v540 = vpack.c.b16 %v358, %v356
    %v541 = vpack.c.b16 %v361, %v359
    %v542 = vpack.c.b16 %v362, %v360
    %v543 = vpack.c.b16 %v365, %v363
    %v544 = vpack.c.b16 %v366, %v364
    %v545 = vpack.c.b16 %v369, %v367
    %v546 = vpack.c.b16 %v370, %v368
    %v547 = vpack.c.b16 %v373, %v371
    %v548 = vpack.c.b16 %v374, %v372
    %v549 = vpack.c.b16 %v377, %v375
    %v550 = vpack.c.b16 %v378, %v376
    %v551 = vpack.c.b16 %v381, %v379
    %v552 = vpack.c.b16 %v382, %v380
    %v553 = vpack.c.b16 %v385, %v383
    %v554 = vpack.c.b16 %v386, %v384
    %v555 = vpack.c.b16 %v389, %v387
    %v556 = vpack.c.b16 %v390, %v388
    %v557 = vpack.c.b16 %v393, %v391
    %v558 = vpack.c.b16 %v394, %v392
    %v559 = vpack.c.b16 %v397, %v395
    %v560 = vpack.c.b16 %v398, %v396
    %v561 = vpack.c.b16 %v401, %v399
    %v562 = vpack.c.b16 %v402, %v400
    %v563 = vpack.c.b16 %v405, %v403
    %v564 = vpack.c.b16 %v406, %v404
    %v565 = vpack.c.b16 %v409, %v407
    %v566 = vpack.c.b16 %v410, %v408
    %v567 = vpack.c.b16 %v413, %v411
    %v568 = vpack.c.b16 %v414, %v412
    %v569 = vpack.c.b16 %v417, %v415
    %v570 = vpack.c.b16 %v418, %v416
    %v571 = vpack.c.b16 %v421, %v419
    %v572 = vpack.c.b16 %v422, %v420
    %v573 = vpack.c.b16 %v425, %v423
    %v574 = vpack.c.b16 %v426, %v424
    %v575 = vpack.c.b16 %v429, %v427
    %v576 = vpack.c.b16 %v430, %v428
    %v577 = vpack.c.b16 %v433, %v431
    %v578 = vpack.c.b16 %v434, %v432
    %v579 = vpack.c.b16 %v437, %v435
    %v580 = vpack.c.b16 %v438, %v436
    %v581 = vpack.c.b16 %v441, %v439
    %v582 = vpack.c.b16 %v442, %v440
    %v583 = vpack.c.b16 %v445, %v443
    %v584 = vpack.c.b16 %v446, %v444
    %v585 = vpack.c.b16 %v449, %v447
    %v586 = vpack.c.b16 %v450, %v448
    %v587 = vpack.c.b16 %v453, %v451
    %v588 = vpack.c.b16 %v454, %v452
    %v589 = vpack.c.b16 %v457, %v455
    %v590 = vpack.c.b16 %v458, %v456
    %v591 = vpack.c.b16 %v461, %v459
    %v592 = vpack.c.b16 %v462, %v460
    %v593 = vpack.c.b16 %v465, %v463
    %v594 = vpack.c.b16 %v466, %v464
    %v595 = vpack.c.b16 %v469, %v467
    %v596 = vpack.c.b16 %v470, %v468
    %v597 = vpack.c.b16 %v473, %v471
    %v598 = vpack.c.b16 %v474, %v472
    %v599 = vpack.c.b16 %v477, %v475
    %v600 = vpack.c.b16 %v478, %v476
    %v601 = vpack.c.b16 %v481, %v479
    %v602 = vpack.c.b16 %v482, %v480
    %v603 = vpack.c.b16 %v485, %v483
    %v604 = vpack.c.b16 %v486, %v484
    %v605 = vpack.c.b16 %v489, %v487
    %v606 = vpack.c.b16 %v490, %v488
    %v607 = vpack.c.b16 %v493, %v491
    %v608 = vpack.c.b16 %v494, %v492
    %v609 = vpack.c.b16 %v497, %v495
    %v610 = vpack.c.b16 %v498, %v496
    %v611 = vpack.c.b16 %v501, %v499
    %v612 = vpack.c.b16 %v502, %v500
    %v613 = vpack.c.b16 %v505, %v503
    %v614 = vpack.c.b16 %v506, %v504
    %v615 = vpack.c.b16 %v509, %v507
    %v616 = vpack.c.b16 %v510, %v508
    %v617 = vpack.c.b16 %v513, %v511
    %v618 = vpack.c.b16 %v514, %v512
    %v619 = vpack.c.b16 %v517, %v515
    %v620 = vpack.c.b16 %v518, %v516
    %v621 = vpack.c.b16 %v521, %v519
    %v622 = vpack.c.b16 %v522, %v520
    %v623 = vpack.c.b16 %v525, %v523
    %v624 = vpack.c.b16 %v526, %v524
    %v625 = vpack.c.b16 %v529, %v527
    %v626 = vpack.c.b16 %v530, %v528
    %723 = vmatpush.bf16.msra.mxu0 %v545
    %724 = vmatpush.bf16.msra.mxu0 %v543
    %725 = vmatpush.bf16.msra.mxu0 %v541
    %726 = vmatpush.bf16.msra.mxu0 %v539
    %727 = vmatpush.bf16.msra.mxu0 %v537
    %728 = vmatpush.bf16.msra.mxu0 %v535
    %729 = vmatpush.bf16.msra.mxu0 %v533
    %730 = vmatpush.bf16.msra.mxu0 %v531
    %731 = vmatmul.bf16.gmra.mxu0 %v135
    %v732 = vpop.f32.mrf.mxu0
    %v733 = vadd.f32 %v239, %v732
    %v734 = vpop.f32.mrf.mxu0
    %v735 = vadd.f32 %v239, %v734
    %736 = vdwg.mxu0
    %737 = vmatpush.bf16.msra.mxu0 %v561
    %738 = vmatpush.bf16.msra.mxu0 %v559
    %739 = vmatpush.bf16.msra.mxu0 %v557
    %740 = vmatpush.bf16.msra.mxu0 %v555
    %741 = vmatpush.bf16.msra.mxu0 %v553
    %742 = vmatpush.bf16.msra.mxu0 %v551
    %743 = vmatpush.bf16.msra.mxu0 %v549
    %744 = vmatpush.bf16.msra.mxu0 %v547
    %745 = vmatmul.bf16.gmra.mxu0 %v136
    %v746 = vpop.f32.mrf.mxu0
    %v747 = vadd.f32 %v733, %v746
    %v748 = vpop.f32.mrf.mxu0
    %v749 = vadd.f32 %v735, %v748
    %750 = vdwg.mxu0
    %751 = vmatpush.bf16.msra.mxu0 %v577
    %752 = vmatpush.bf16.msra.mxu0 %v575
    %753 = vmatpush.bf16.msra.mxu0 %v573
    %754 = vmatpush.bf16.msra.mxu0 %v571
    %755 = vmatpush.bf16.msra.mxu0 %v569
    %756 = vmatpush.bf16.msra.mxu0 %v567
    %757 = vmatpush.bf16.msra.mxu0 %v565
    %758 = vmatpush.bf16.msra.mxu0 %v563
    %759 = vmatmul.bf16.gmra.mxu0 %v137
    %v760 = vpop.f32.mrf.mxu0
    %v761 = vadd.f32 %v747, %v760
    %v762 = vpop.f32.mrf.mxu0
    %v763 = vadd.f32 %v749, %v762
    %764 = vdwg.mxu0
    %765 = vmatpush.bf16.msra.mxu0 %v593
    %766 = vmatpush.bf16.msra.mxu0 %v591
    %767 = vmatpush.bf16.msra.mxu0 %v589
    %768 = vmatpush.bf16.msra.mxu0 %v587
    %769 = vmatpush.bf16.msra.mxu0 %v585
    %770 = vmatpush.bf16.msra.mxu0 %v583
    %771 = vmatpush.bf16.msra.mxu0 %v581
    %772 = vmatpush.bf16.msra.mxu0 %v579
    %773 = vmatmul.bf16.gmra.mxu0 %v138
    %v774 = vpop.f32.mrf.mxu0
    %v775 = vadd.f32 %v761, %v774
    %v776 = vpop.f32.mrf.mxu0
    %v777 = vadd.f32 %v763, %v776
    %778 = vdwg.mxu0
    %779 = vmatpush.bf16.msra.mxu0 %v609
    %780 = vmatpush.bf16.msra.mxu0 %v607
    %781 = vmatpush.bf16.msra.mxu0 %v605
    %782 = vmatpush.bf16.msra.mxu0 %v603
    %783 = vmatpush.bf16.msra.mxu0 %v601
    %784 = vmatpush.bf16.msra.mxu0 %v599
    %785 = vmatpush.bf16.msra.mxu0 %v597
    %786 = vmatpush.bf16.msra.mxu0 %v595
    %787 = vmatmul.bf16.gmra.mxu0 %v139
    %v788 = vpop.f32.mrf.mxu0
    %v789 = vadd.f32 %v775, %v788
    %v790 = vpop.f32.mrf.mxu0
    %v791 = vadd.f32 %v777, %v790
    %792 = vdwg.mxu0
    %793 = vmatpush.bf16.msra.mxu0 %v625
    %794 = vmatpush.bf16.msra.mxu0 %v623
    %795 = vmatpush.bf16.msra.mxu0 %v621
    %796 = vmatpush.bf16.msra.mxu0 %v619
    %797 = vmatpush.bf16.msra.mxu0 %v617
    %798 = vmatpush.bf16.msra.mxu0 %v615
    %799 = vmatpush.bf16.msra.mxu0 %v613
    %800 = vmatpush.bf16.msra.mxu0 %v611
    %801 = vmatmul.bf16.gmra.mxu0 %v140
    %v802 = vpop.f32.mrf.mxu0
    %v803 = vadd.f32 %v789, %v802
    %v804 = vpop.f32.mrf.mxu0
    %v805 = vadd.f32 %v791, %v804
    %806 = vdwg.mxu0
    %807 = vmatpush.bf16.msra.mxu0 %v546
    %808 = vmatpush.bf16.msra.mxu0 %v544
    %809 = vmatpush.bf16.msra.mxu0 %v542
    %810 = vmatpush.bf16.msra.mxu0 %v540
    %811 = vmatpush.bf16.msra.mxu0 %v538
    %812 = vmatpush.bf16.msra.mxu0 %v536
    %813 = vmatpush.bf16.msra.mxu0 %v534
    %814 = vmatpush.bf16.msra.mxu0 %v532
    %815 = vmatmul.bf16.gmra.mxu0 %v135
    %v816 = vpop.f32.mrf.mxu0
    %v817 = vadd.f32 %v240, %v816
    %v818 = vpop.f32.mrf.mxu0
    %v819 = vadd.f32 %v240, %v818
    %820 = vdwg.mxu0
    %821 = vmatpush.bf16.msra.mxu0 %v562
    %822 = vmatpush.bf16.msra.mxu0 %v560
    %823 = vmatpush.bf16.msra.mxu0 %v558
    %824 = vmatpush.bf16.msra.mxu0 %v556
    %825 = vmatpush.bf16.msra.mxu0 %v554
    %826 = vmatpush.bf16.msra.mxu0 %v552
    %827 = vmatpush.bf16.msra.mxu0 %v550
    %828 = vmatpush.bf16.msra.mxu0 %v548
    %829 = vmatmul.bf16.gmra.mxu0 %v136
    %v830 = vpop.f32.mrf.mxu0
    %v831 = vadd.f32 %v817, %v830
    %v832 = vpop.f32.mrf.mxu0
    %v833 = vadd.f32 %v819, %v832
    %834 = vdwg.mxu0
    %835 = vmatpush.bf16.msra.mxu0 %v578
    %836 = vmatpush.bf16.msra.mxu0 %v576
    %837 = vmatpush.bf16.msra.mxu0 %v574
    %838 = vmatpush.bf16.msra.mxu0 %v572
    %839 = vmatpush.bf16.msra.mxu0 %v570
    %840 = vmatpush.bf16.msra.mxu0 %v568
    %841 = vmatpush.bf16.msra.mxu0 %v566
    %842 = vmatpush.bf16.msra.mxu0 %v564
    %843 = vmatmul.bf16.gmra.mxu0 %v137
    %v844 = vpop.f32.mrf.mxu0
    %v845 = vadd.f32 %v831, %v844
    %v846 = vpop.f32.mrf.mxu0
    %v847 = vadd.f32 %v833, %v846
    %848 = vdwg.mxu0
    %849 = vmatpush.bf16.msra.mxu0 %v594
    %850 = vmatpush.bf16.msra.mxu0 %v592
    %851 = vmatpush.bf16.msra.mxu0 %v590
    %852 = vmatpush.bf16.msra.mxu0 %v588
    %853 = vmatpush.bf16.msra.mxu0 %v586
    %854 = vmatpush.bf16.msra.mxu0 %v584
    %855 = vmatpush.bf16.msra.mxu0 %v582
    %856 = vmatpush.bf16.msra.mxu0 %v580
    %857 = vmatmul.bf16.gmra.mxu0 %v138
    %v858 = vpop.f32.mrf.mxu0
    %v859 = vadd.f32 %v845, %v858
    %v860 = vpop.f32.mrf.mxu0
    %v861 = vadd.f32 %v847, %v860
    %862 = vdwg.mxu0
    %863 = vmatpush.bf16.msra.mxu0 %v610
    %864 = vmatpush.bf16.msra.mxu0 %v608
    %865 = vmatpush.bf16.msra.mxu0 %v606
    %866 = vmatpush.bf16.msra.mxu0 %v604
    %867 = vmatpush.bf16.msra.mxu0 %v602
    %868 = vmatpush.bf16.msra.mxu0 %v600
    %869 = vmatpush.bf16.msra.mxu0 %v598
    %870 = vmatpush.bf16.msra.mxu0 %v596
    %871 = vmatmul.bf16.gmra.mxu0 %v139
    %v872 = vpop.f32.mrf.mxu0
    %v873 = vadd.f32 %v859, %v872
    %v874 = vpop.f32.mrf.mxu0
    %v875 = vadd.f32 %v861, %v874
    %876 = vdwg.mxu0
    %877 = vmatpush.bf16.msra.mxu0 %v626
    %878 = vmatpush.bf16.msra.mxu0 %v624
    %879 = vmatpush.bf16.msra.mxu0 %v622
    %880 = vmatpush.bf16.msra.mxu0 %v620
    %881 = vmatpush.bf16.msra.mxu0 %v618
    %882 = vmatpush.bf16.msra.mxu0 %v616
    %883 = vmatpush.bf16.msra.mxu0 %v614
    %884 = vmatpush.bf16.msra.mxu0 %v612
    %885 = vmatmul.bf16.gmra.mxu0 %v140
    %v886 = vpop.f32.mrf.mxu0
    %v887 = vadd.f32 %v873, %v886
    %v888 = vpop.f32.mrf.mxu0
    %v889 = vadd.f32 %v875, %v888
    %890 = vdwg.mxu0
    %v891 = vmax.f32 %v803, 0.0
    %v892 = vmax.f32 %v887, 0.0
    %v893 = vmax.f32 %v805, 0.0
    %v894 = vmax.f32 %v889, 0.0
    %v895 = vpack.c.bf16 %v893, %v891
    %v896 = vpack.c.bf16 %v894, %v892
    %v897 = vld [vmem:[#allocation8] sm:$0xf]
    %v898 = vld [vmem:[#allocation8 + $0x4] sm:$0xf]
    %v899 = vld [vmem:[#allocation8 + $0x8] sm:$0xf]
    %v900 = vld [vmem:[#allocation8 + $0xc] sm:$0xf]
    %v901 = vld [vmem:[#allocation8 + $0x10] sm:$0xf]
    %v902 = vld [vmem:[#allocation8 + $0x14] sm:$0xf]
    %v903 = vld [vmem:[#allocation8 + $0x18] sm:$0xf]
    %v904 = vld [vmem:[#allocation8 + $0x1c] sm:$0xf]
    %v905 = vld [vmem:[#allocation8 + $0x20] sm:$0xf]
    %v906 = vld [vmem:[#allocation8 + $0x24] sm:$0xf]
    %v907 = vld [vmem:[#allocation8 + $0x28] sm:$0xf]
    %v908 = vld [vmem:[#allocation8 + $0x2c] sm:$0xf]
    %v909 = vld [vmem:[#allocation8 + $0x30] sm:$0xf]
    %v910 = vld [vmem:[#allocation8 + $0x34] sm:$0xf]
    %v911 = vld [vmem:[#allocation8 + $0x38] sm:$0xf]
    %v912 = vld [vmem:[#allocation8 + $0x3c] sm:$0xf]
    %v913 = vld [vmem:[#allocation8 + $0x40] sm:$0xf]
    %v914 = vld [vmem:[#allocation8 + $0x44] sm:$0xf]
    %v915 = vld [vmem:[#allocation8 + $0x48] sm:$0xf]
    %v916 = vld [vmem:[#allocation8 + $0x4c] sm:$0xf]
    %v917 = vld [vmem:[#allocation8 + $0x50] sm:$0xf]
    %v918 = vld [vmem:[#allocation8 + $0x54] sm:$0xf]
    %v919 = vld [vmem:[#allocation8 + $0x58] sm:$0xf]
    %v920 = vld [vmem:[#allocation8 + $0x5c] sm:$0xf]
    %v921 = vld [vmem:[#allocation8 + $0x60] sm:$0xf]
    %v922 = vld [vmem:[#allocation8 + $0x64] sm:$0xf]
    %v923 = vld [vmem:[#allocation8 + $0x68] sm:$0xf]
    %v924 = vld [vmem:[#allocation8 + $0x6c] sm:$0xf]
    %v925 = vld [vmem:[#allocation8 + $0x70] sm:$0xf]
    %v926 = vld [vmem:[#allocation8 + $0x74] sm:$0xf]
    %v927 = vld [vmem:[#allocation8 + $0x78] sm:$0xf]
    %v928 = vld [vmem:[#allocation8 + $0x7c] sm:$0xf]
    %v929 = vld [vmem:[%s6] sm:$0x1]
    %v931 = vperm.slane %v929, 0
    %v965 = vunpack.c.l.b16 %v897
    %v966 = vunpack.c.l.b16 %v898
    %v967 = vunpack.c.l.b16 %v899
    %v968 = vunpack.c.l.b16 %v900
    %v969 = vunpack.c.l.b16 %v901
    %v970 = vunpack.c.l.b16 %v902
    %v971 = vunpack.c.l.b16 %v903
    %v972 = vunpack.c.l.b16 %v904
    %v973 = vunpack.c.l.b16 %v905
    %v974 = vunpack.c.l.b16 %v906
    %v975 = vunpack.c.l.b16 %v907
    %v976 = vunpack.c.l.b16 %v908
    %v977 = vunpack.c.l.b16 %v909
    %v978 = vunpack.c.l.b16 %v910
    %v979 = vunpack.c.l.b16 %v911
    %v980 = vunpack.c.l.b16 %v912
    %v981 = vunpack.c.l.b16 %v913
    %v982 = vunpack.c.l.b16 %v914
    %v983 = vunpack.c.l.b16 %v915
    %v984 = vunpack.c.l.b16 %v916
    %v985 = vunpack.c.l.b16 %v917
    %v986 = vunpack.c.l.b16 %v918
    %v987 = vunpack.c.l.b16 %v919
    %v988 = vunpack.c.l.b16 %v920
    %v989 = vunpack.c.l.b16 %v921
    %v990 = vunpack.c.l.b16 %v922
    %v991 = vunpack.c.l.b16 %v923
    %v992 = vunpack.c.l.b16 %v924
    %v993 = vunpack.c.l.b16 %v925
    %v994 = vunpack.c.l.b16 %v926
    %v995 = vunpack.c.l.b16 %v927
    %v996 = vunpack.c.l.b16 %v928
    %v997 = vpack.c.b16 %v966, %v965
    %v998 = vpack.c.b16 %v968, %v967
    %v999 = vpack.c.b16 %v970, %v969
    %v1000 = vpack.c.b16 %v972, %v971
    %v1001 = vpack.c.b16 %v974, %v973
    %v1002 = vpack.c.b16 %v976, %v975
    %v1003 = vpack.c.b16 %v978, %v977
    %v1004 = vpack.c.b16 %v980, %v979
    %v1005 = vpack.c.b16 %v982, %v981
    %v1006 = vpack.c.b16 %v984, %v983
    %v1007 = vpack.c.b16 %v986, %v985
    %v1008 = vpack.c.b16 %v988, %v987
    %v1009 = vpack.c.b16 %v990, %v989
    %v1010 = vpack.c.b16 %v992, %v991
    %v1011 = vpack.c.b16 %v994, %v993
    %v1012 = vpack.c.b16 %v996, %v995
    %1029 = vmatpush.bf16.msra.mxu0 %v1004
    %1030 = vmatpush.bf16.msra.mxu0 %v1003
    %1031 = vmatpush.bf16.msra.mxu0 %v1002
    %1032 = vmatpush.bf16.msra.mxu0 %v1001
    %1033 = vmatpush.bf16.msra.mxu0 %v1000
    %1034 = vmatpush.bf16.msra.mxu0 %v999
    %1035 = vmatpush.bf16.msra.mxu0 %v998
    %1036 = vmatpush.bf16.msra.mxu0 %v997
    %1037 = vmatmul.bf16.gmra.mxu0 %v895
    %v1038 = vpop.f32.mrf.mxu0
    %v1039 = vadd.f32 %v931, %v1038
    %v1040 = vpop.f32.mrf.mxu0
    %v1041 = vadd.f32 %v931, %v1040
    %1042 = vdwg.mxu0
    %1043 = vmatpush.bf16.msra.mxu0 %v1012
    %1044 = vmatpush.bf16.msra.mxu0 %v1011
    %1045 = vmatpush.bf16.msra.mxu0 %v1010
    %1046 = vmatpush.bf16.msra.mxu0 %v1009
    %1047 = vmatpush.bf16.msra.mxu0 %v1008
    %1048 = vmatpush.bf16.msra.mxu0 %v1007
    %1049 = vmatpush.bf16.msra.mxu0 %v1006
    %1050 = vmatpush.bf16.msra.mxu0 %v1005
    %1051 = vmatmul.bf16.gmra.mxu0 %v896
    %v1052 = vpop.f32.mrf.mxu0
    %v1053 = vadd.f32 %v1039, %v1052
    %v1054 = vpop.f32.mrf.mxu0
    %v1055 = vadd.f32 %v1041, %v1054
    %1056 = vdwg.mxu0
    %1057 = vst [vmem:[%s7] sm:$0xff] %v1053
    %1058 = vst [vmem:[%s7 + $0x8] sm:$0xff] %v1055
    // Predicated region
    $region44: #{bert_mlp_classifier_forward.1} parent=1 // pred_check
      _
    $region45: #{bert_mlp_classifier_forward.1} parent=1 // pred_check_branch
      %1060 = sbr.rel (0) target = $region47
    $region46: #{bert_mlp_classifier_forward.1} parent=1 // pred_region
      _
    $region47: #{bert_mlp_classifier_forward.1} parent=1 // pred_fallthru
      _
    // Predicated region
    $region48: #{bert_mlp_classifier_forward.1} parent=1 // pred_check
      _
    $region49: #{bert_mlp_classifier_forward.1} parent=1 // pred_check_branch
      %1062 = sbr.rel (0) target = $region51
    $region50: #{bert_mlp_classifier_forward.1} parent=1 // pred_region
      _
    $region51: #{bert_mlp_classifier_forward.1} parent=1 // pred_fallthru
      _
    %1063 = vsyncpa [#allocation7], 1
    %1064 = vsyncpa [#allocation9], 1
  %1065 = vsyncmov [#allocation3]
  %s1066 = vpop.sfrf %1065
  %p1067 = scmp.eq.s32.totalorder %s1066, 0
  %p1068 = pneg %p1067
  %1070 = shalt.err (%p1068)

</llo_original>
